<compile_context>
chip_gen: v7x
topology: tpu7x:2x2x1
jax: 0.10.0
libtpu: 0.0.40
codegen_flags: <defaults>
</compile_context>

<pallas_src>
import jax
import jax.numpy as jnp
from jax.experimental import pallas as pl
from jax.experimental.pallas import tpu as pltpu

HID_DIM = 128
OUT_DIM = 2
DEFAULT_BLOCK_B = 1024  # batch rows per tile (multiple of 8)


def _discriminator_kernel(x_ref, w1_ref, b1_ref, w2_ref, b2_ref, o_ref):
    # x tile: [TB, H]; weights/biases are resident (same block every step).
    x = x_ref[...]

    # block_1: Linear(H, H) + LeakyReLU(0.1).
    # MXU matmul with f32 accumulation (bf16 inputs hit the bf16 MXU path);
    # bias add + activation stay in f32 (free, and v5e VPU has no bf16).
    h = jnp.dot(x, w1_ref[...], preferred_element_type=jnp.float32)
    h = h + b1_ref[...].astype(jnp.float32)
    h = jnp.maximum(h, 0.1 * h)  # LeakyReLU(negative_slope=0.1), slope < 1

    # fclayer: Linear(H, 2).  Tiny matmul; keep everything in f32 here.
    out = jnp.dot(h, w2_ref[...].astype(jnp.float32),
                  preferred_element_type=jnp.float32)
    out = out + b2_ref[...].astype(jnp.float32)
    o_ref[...] = out.astype(o_ref.dtype)


def discriminator_forward(x, w1, b1, w2, b2, *, block_b=DEFAULT_BLOCK_B):
    """x: [B, 128]; w1: [128, 128]; b1: [1, 128]; w2: [128, 2]; b2: [1, 2]."""
    B, H = x.shape
    assert H == HID_DIM
    assert w1.shape == (HID_DIM, HID_DIM)
    assert w2.shape == (HID_DIM, OUT_DIM)
    b1 = jnp.asarray(b1, jnp.float32).reshape(1, HID_DIM)
    b2 = jnp.asarray(b2, jnp.float32).reshape(1, OUT_DIM)

    # Batch tile: multiple of 8 sublanes, capped at block_b.  Pad B up to a
    # multiple of the tile so every block is full; padded rows are sliced off.
    tb = min(block_b, max(8, ((B + 7) // 8) * 8))
    b_pad = ((B + tb - 1) // tb) * tb
    if b_pad != B:
        x = jnp.pad(x, ((0, b_pad - B), (0, 0)))
    grid = (b_pad // tb,)

    bytes_accessed = (
        b_pad * HID_DIM * x.dtype.itemsize          # x stream (dominant)
        + w1.size * w1.dtype.itemsize
        + w2.size * w2.dtype.itemsize
        + b1.size * 4 + b2.size * 4
        + b_pad * OUT_DIM * 4                       # output
    )
    cost = pl.CostEstimate(
        flops=2 * b_pad * HID_DIM * (HID_DIM + OUT_DIM),
        transcendentals=0,
        bytes_accessed=bytes_accessed,
    )

    out = pl.pallas_call(
        _discriminator_kernel,
        out_shape=jax.ShapeDtypeStruct((b_pad, OUT_DIM), jnp.float32),
        grid=grid,
        in_specs=[
            pl.BlockSpec((tb, HID_DIM), lambda i: (i, 0)),       # x (streamed)
            pl.BlockSpec((HID_DIM, HID_DIM), lambda i: (0, 0)),  # w1 (resident)
            pl.BlockSpec((1, HID_DIM), lambda i: (0, 0)),        # b1 (resident)
            pl.BlockSpec((HID_DIM, OUT_DIM), lambda i: (0, 0)),  # w2 (resident)
            pl.BlockSpec((1, OUT_DIM), lambda i: (0, 0)),        # b2 (resident)
        ],
        out_specs=pl.BlockSpec((tb, OUT_DIM), lambda i: (i, 0)),
        compiler_params=pltpu.CompilerParams(
            dimension_semantics=("parallel",)),  # shards tiles across v7x's 2 TCs
        cost_estimate=cost,
    )(x, w1, b1, w2, b2)
    return out[:B]


def init_params(key, hid_dim=HID_DIM, out_dim=OUT_DIM):
    """Deterministic synthetic parameters (PyTorch-style uniform fan-in init)."""
    k1, k2, k3, k4 = jax.random.split(key, 4)
    bound = 1.0 / jnp.sqrt(hid_dim)
    w1 = jax.random.uniform(k1, (hid_dim, hid_dim), jnp.float32, -bound, bound)
    b1 = jax.random.uniform(k2, (1, hid_dim), jnp.float32, -bound, bound)
    w2 = jax.random.uniform(k3, (hid_dim, out_dim), jnp.float32, -bound, bound)
    b2 = jax.random.uniform(k4, (1, out_dim), jnp.float32, -bound, bound)
    return w1, b1, w2, b2


def reference_forward(x, w1, b1, w2, b2):
    x = x.astype(jnp.float32)
    h = x @ w1.astype(jnp.float32) + b1
    h = jnp.where(h > 0, h, 0.1 * h)
    return h @ w2.astype(jnp.float32) + b2


if __name__ == "__main__":
    key = jax.random.PRNGKey(0)
    kx, kp = jax.random.split(key)
    w1, b1, w2, b2 = init_params(kp)

    # --- small f32 check (single tile) ---
    B = 8
    x = jax.random.normal(kx, (B, HID_DIM), dtype=jnp.float32)
    out = jax.block_until_ready(discriminator_forward(x, w1, b1, w2, b2))
    ref = reference_forward(x, w1, b1, w2, b2)
    assert out.shape == (B, OUT_DIM)
    assert jnp.allclose(out, ref, atol=1e-5, rtol=1e-5), "f32 mismatch vs reference"

    # --- bf16 streaming path with a ragged batch (exercises grid + padding) ---
    B2 = 300
    x2 = jax.random.normal(jax.random.PRNGKey(1), (B2, HID_DIM), dtype=jnp.float32)
    x2_bf = x2.astype(jnp.bfloat16)
    w1_bf = w1.astype(jnp.bfloat16)
    w2_bf = w2.astype(jnp.bfloat16)
    out2 = jax.block_until_ready(
        discriminator_forward(x2_bf, w1_bf, b1, w2_bf, b2, block_b=128))
    ref2 = reference_forward(x2_bf, w1_bf, b1, w2_bf, b2)
    assert out2.shape == (B2, OUT_DIM)
    assert jnp.allclose(out2, ref2, atol=1e-2, rtol=1e-2), "bf16 mismatch vs reference"

    print("KERNEL_OK")
</pallas_src>

<mosaic_0001>
module attributes {stable_mosaic.version = 11 : i64} {
  func.func @_discriminator_kernel(%arg0: i32, %arg1: memref<8x128xf32, #tpu.memory_space<vmem>>, %arg2: memref<128x128xf32, #tpu.memory_space<vmem>>, %arg3: memref<1x128xf32, #tpu.memory_space<vmem>>, %arg4: memref<128x2xf32, #tpu.memory_space<vmem>>, %arg5: memref<1x2xf32, #tpu.memory_space<vmem>>, %arg6: memref<8x2xf32, #tpu.memory_space<vmem>>) attributes {dimension_semantics = [#tpu.dimension_semantics<parallel>], iteration_bounds = array<i64: 1>, scalar_prefetch = 0 : i64, scratch_operands = 0 : i64, tpu.core_type = #tpu.core_type<tc>, window_params = [{transform_indices = @transform_0, window_bounds = array<i64: 8, 128>}, {pipeline_mode = #tpu.pipeline_mode<synchronous>, transform_indices = @transform_1, window_bounds = array<i64: 128, 128>}, {pipeline_mode = #tpu.pipeline_mode<synchronous>, transform_indices = @transform_2, window_bounds = array<i64: 1, 128>}, {pipeline_mode = #tpu.pipeline_mode<synchronous>, transform_indices = @transform_3, window_bounds = array<i64: 128, 2>}, {pipeline_mode = #tpu.pipeline_mode<synchronous>, transform_indices = @transform_4, window_bounds = array<i64: 1, 2>}, {transform_indices = @transform_5, window_bounds = array<i64: 8, 2>}]} {
    %c0 = arith.constant 0 : index
    %c0_0 = arith.constant 0 : index
    %0 = vector.load %arg1[%c0, %c0_0] : memref<8x128xf32, #tpu.memory_space<vmem>>, vector<8x128xf32>
    %c0_1 = arith.constant 0 : index
    %c0_2 = arith.constant 0 : index
    %1 = vector.load %arg2[%c0_1, %c0_2] : memref<128x128xf32, #tpu.memory_space<vmem>>, vector<128x128xf32>
    %cst = arith.constant dense<0.000000e+00> : vector<8x128xf32>
    %2 = tpu.matmul %0, %1, %cst {dimension_numbers = #tpu.dot_dimension_numbers<[1], [0], [0], [1], [0, 0, 1, 1], [], []>} : vector<8x128xf32>, vector<128x128xf32>, vector<8x128xf32> -> vector<8x128xf32>
    %c0_3 = arith.constant 0 : index
    %c0_4 = arith.constant 0 : index
    %3 = vector.load %arg3[%c0_3, %c0_4] : memref<1x128xf32, #tpu.memory_space<vmem>>, vector<1x128xf32>
    %4 = vector.broadcast %3 : vector<1x128xf32> to vector<8x128xf32>
    %5 = arith.addf %2, %4 : vector<8x128xf32>
    %cst_5 = arith.constant 1.000000e-01 : f32
    %6 = vector.broadcast %cst_5 : f32 to vector<8x128xf32>
    %7 = arith.mulf %6, %5 : vector<8x128xf32>
    %8 = arith.maximumf %5, %7 : vector<8x128xf32>
    %c0_6 = arith.constant 0 : index
    %c0_7 = arith.constant 0 : index
    %9 = vector.load %arg4[%c0_6, %c0_7] : memref<128x2xf32, #tpu.memory_space<vmem>>, vector<128x2xf32>
    %cst_8 = arith.constant dense<0.000000e+00> : vector<8x2xf32>
    %10 = tpu.matmul %8, %9, %cst_8 {dimension_numbers = #tpu.dot_dimension_numbers<[1], [0], [0], [1], [0, 0, 1, 1], [], []>} : vector<8x128xf32>, vector<128x2xf32>, vector<8x2xf32> -> vector<8x2xf32>
    %c0_9 = arith.constant 0 : index
    %c0_10 = arith.constant 0 : index
    %11 = vector.load %arg5[%c0_9, %c0_10] : memref<1x2xf32, #tpu.memory_space<vmem>>, vector<1x2xf32>
    %12 = vector.broadcast %11 : vector<1x2xf32> to vector<8x2xf32>
    %13 = arith.addf %10, %12 : vector<8x2xf32>
    %c0_11 = arith.constant 0 : index
    %c0_12 = arith.constant 0 : index
    %14 = vector.load %arg6[%c0_11, %c0_12] : memref<8x2xf32, #tpu.memory_space<vmem>>, vector<8x2xf32>
    tpu.vector_store %arg6[%c0_11, %c0_12], %13 {strides = array<i32>} : memref<8x2xf32, #tpu.memory_space<vmem>>, vector<8x2xf32>,
    return
  }
  func.func @transform_0(%arg0: i32) -> (i32, i32) {
    %c0_i32 = arith.constant 0 : i32
    %c0_i32_0 = arith.constant 0 : i32
    return %arg0, %c0_i32 : i32, i32
  }
  func.func @transform_1(%arg0: i32) -> (i32, i32) {
    %c0_i32 = arith.constant 0 : i32
    %c0_i32_0 = arith.constant 0 : i32
    %c0_i32_1 = arith.constant 0 : i32
    return %c0_i32, %c0_i32_0 : i32, i32
  }
  func.func @transform_2(%arg0: i32) -> (i32, i32) {
    %c0_i32 = arith.constant 0 : i32
    %c0_i32_0 = arith.constant 0 : i32
    %c0_i32_1 = arith.constant 0 : i32
    return %c0_i32, %c0_i32_0 : i32, i32
  }
  func.func @transform_3(%arg0: i32) -> (i32, i32) {
    %c0_i32 = arith.constant 0 : i32
    %c0_i32_0 = arith.constant 0 : i32
    %c0_i32_1 = arith.constant 0 : i32
    return %c0_i32, %c0_i32_0 : i32, i32
  }
  func.func @transform_4(%arg0: i32) -> (i32, i32) {
    %c0_i32 = arith.constant 0 : i32
    %c0_i32_0 = arith.constant 0 : i32
    %c0_i32_1 = arith.constant 0 : i32
    return %c0_i32, %c0_i32_0 : i32, i32
  }
  func.func @transform_5(%arg0: i32) -> (i32, i32) {
    %c0_i32 = arith.constant 0 : i32
    %c0_i32_0 = arith.constant 0 : i32
    return %arg0, %c0_i32 : i32, i32
  }
}

</mosaic_0001>

<llo_original>
// kernel: tpu_custom_call.1
$region0: #{tpu_custom_call.1}
  #allocation0 [shape = 'u32[]', space=smem, size = 0x4, offset = 0x4, fixed_abs, tag = 'smem constant byte address 0x4 - core index']
  #allocation1 [shape = 'u32[144,128]{1,0:T(1,128)}', space=vmem, size = 0x12000, scoped, tag = 'internal scratch']
  %s0 = inlined_call_operand.hbm [shape: f32[8,128], index: 0, kind: input, shape index: {}]
  %s1 = inlined_call_operand.vmem [shape: f32[128,128], index: 1, kind: input, shape index: {}]
  %s2 = inlined_call_operand.vmem [shape: f32[1,128], index: 2, kind: input, shape index: {}]
  %s3 = inlined_call_operand.vmem [shape: f32[128,2], index: 3, kind: input, shape index: {}]
  %s4 = inlined_call_operand.vmem [shape: f32[1,2], index: 4, kind: input, shape index: {}]
  %s5 = inlined_call_operand.vmem [shape: f32[8,2], index: 5, kind: output, shape index: {}]
  %s6 = sld [smem:[#allocation0]]
  $region34: #{tpu_custom_call.1} parent=0
    _
  %s8 = ssub.s32 1, %s6
  %s9 = scalar_select 0, %s8, %s6
  $region1: #{tpu_custom_call.1} parent=0
    #allocation2 [shape = 'u8[4096]{0}', space=vmem, size = 0x1000, scoped, tag = 'input window, operand 0, single buffered']
    #allocation3 [shape = 's32[1]{0}', space=sflag, size = 0x4, scoped, tag = 'scoped memory for tpu_custom_call.1']
    %10 = vsyncpa [#allocation3], 0
    // Predicated region
    $region2: #{tpu_custom_call.1} parent=1 // pred_check
      _
    $region3: #{tpu_custom_call.1} parent=1 // pred_check_branch
      %12 = sbr.rel (0) target = $region5
    $region4: #{tpu_custom_call.1} parent=1 // pred_region
      %s14 = ssub.s32 128, 128
      %15 = vsyncadd [#allocation3], %s14
      %s17 = sshll.u32 [#allocation2], 4
      %s18 = int_to_ptr.vmem [resolvable:$true] %s17
      %20 = dma.hbm_to_vmem [thread:$0]  %s0, 128, %s18, [#allocation3]
    $region5: #{tpu_custom_call.1} parent=1 // pred_fallthru
      _
    // Predicated region
    $region6: #{tpu_custom_call.1} parent=1 // pred_check
      _
    $region7: #{tpu_custom_call.1} parent=1 // pred_check_branch
      %22 = sbr.rel (0) target = $region9
    $region8: #{tpu_custom_call.1} parent=1 // pred_region
      _
    $region9: #{tpu_custom_call.1} parent=1 // pred_fallthru
      _
    // Predicated region
    $region10: #{tpu_custom_call.1} parent=1 // pred_check
      _
    $region11: #{tpu_custom_call.1} parent=1 // pred_check_branch
      %24 = sbr.rel (0) target = $region13
    $region12: #{tpu_custom_call.1} parent=1 // pred_region
      _
    $region13: #{tpu_custom_call.1} parent=1 // pred_fallthru
      _
    // Predicated region
    $region14: #{tpu_custom_call.1} parent=1 // pred_check
      _
    $region15: #{tpu_custom_call.1} parent=1 // pred_check_branch
      %26 = sbr.rel (0) target = $region17
    $region16: #{tpu_custom_call.1} parent=1 // pred_region
      _
    $region17: #{tpu_custom_call.1} parent=1 // pred_fallthru
      _
    // Predicated region
    $region18: #{tpu_custom_call.1} parent=1 // pred_check
      _
    $region19: #{tpu_custom_call.1} parent=1 // pred_check_branch
      %28 = sbr.rel (0) target = $region21
    $region20: #{tpu_custom_call.1} parent=1 // pred_region
      _
    $region21: #{tpu_custom_call.1} parent=1 // pred_fallthru
      _
    // Predicated region
    $region22: #{tpu_custom_call.1} parent=1 // pred_check
      _
    $region23: #{tpu_custom_call.1} parent=1 // pred_check_branch
      %30 = sbr.rel (0) target = $region25
    $region24: #{tpu_custom_call.1} parent=1 // pred_region
      %31 = dma.done [#allocation3], 128
    $region25: #{tpu_custom_call.1} parent=1 // pred_fallthru
      _
    %v32 = vld [vmem:[#allocation2] sm:$0xff]
    %v33 = vld [vmem:[%s1] sm:$0xff]
    %v34 = vld [vmem:[%s1 + $0x8] sm:$0xff]
    %v35 = vld [vmem:[%s1 + $0x10] sm:$0xff]
    %v36 = vld [vmem:[%s1 + $0x18] sm:$0xff]
    %v37 = vld [vmem:[%s1 + $0x20] sm:$0xff]
    %v38 = vld [vmem:[%s1 + $0x28] sm:$0xff]
    %v39 = vld [vmem:[%s1 + $0x30] sm:$0xff]
    %v40 = vld [vmem:[%s1 + $0x38] sm:$0xff]
    %v41 = vld [vmem:[%s1 + $0x40] sm:$0xff]
    %v42 = vld [vmem:[%s1 + $0x48] sm:$0xff]
    %v43 = vld [vmem:[%s1 + $0x50] sm:$0xff]
    %v44 = vld [vmem:[%s1 + $0x58] sm:$0xff]
    %v45 = vld [vmem:[%s1 + $0x60] sm:$0xff]
    %v46 = vld [vmem:[%s1 + $0x68] sm:$0xff]
    %v47 = vld [vmem:[%s1 + $0x70] sm:$0xff]
    %v48 = vld [vmem:[%s1 + $0x78] sm:$0xff]
    %v49 = vld [vmem:[%s2] sm:$0x1]
    %v51 = vlaneseq
    %v52 = vshrl.u32 %v51, 7
    %v53 = vsub.s32 0, %v52
    %v54 = vrot.slane %v49, %v53
    %56 = vmatprep.subr.mxu0 0.0
    %57 = vmatpush1.msra.mxu0 %v33
    %58 = vmatprep.subr.mxu0 0.0
    %59 = vmatpush1.msra.mxu0 %v34
    %60 = vmatprep.subr.mxu0 0.0
    %61 = vmatpush1.msra.mxu0 %v35
    %62 = vmatprep.subr.mxu0 0.0
    %63 = vmatpush1.msra.mxu0 %v36
    %64 = vmatprep.subr.mxu0 0.0
    %65 = vmatpush1.msra.mxu0 %v37
    %66 = vmatprep.subr.mxu0 0.0
    %67 = vmatpush1.msra.mxu0 %v38
    %68 = vmatprep.subr.mxu0 0.0
    %69 = vmatpush1.msra.mxu0 %v39
    %70 = vmatprep.subr.mxu0 0.0
    %71 = vmatpush1.msra.mxu0 %v40
    %72 = vmatprep.subr.mxu0 0.0
    %73 = vmatpush1.msra.mxu0 %v41
    %74 = vmatprep.subr.mxu0 0.0
    %75 = vmatpush1.msra.mxu0 %v42
    %76 = vmatprep.subr.mxu0 0.0
    %77 = vmatpush1.msra.mxu0 %v43
    %78 = vmatprep.subr.mxu0 0.0
    %79 = vmatpush1.msra.mxu0 %v44
    %80 = vmatprep.subr.mxu0 0.0
    %81 = vmatpush1.msra.mxu0 %v45
    %82 = vmatprep.subr.mxu0 0.0
    %83 = vmatpush1.msra.mxu0 %v46
    %84 = vmatprep.subr.mxu0 0.0
    %85 = vmatpush1.msra.mxu0 %v47
    %86 = vmatprep.subr.mxu0 0.0
    %87 = vmatpush1.msra.mxu0 %v48
    %88 = vmatprep.subr.mxu0 0.0
    %89 = vmatpush1.msra.mxu0 0.0
    %90 = vmatprep.subr.mxu0 0.0
    %91 = vmatpush1.msra.mxu0 0.0
    %92 = vmatprep.subr.mxu0 0.0
    %93 = vmatpush1.msra.mxu0 0.0
    %94 = vmatprep.subr.mxu0 0.0
    %95 = vmatpush1.msra.mxu0 0.0
    %96 = vmatprep.subr.mxu0 0.0
    %97 = vmatpush1.msra.mxu0 0.0
    %98 = vmatprep.subr.mxu0 0.0
    %99 = vmatpush1.msra.mxu0 0.0
    %100 = vmatprep.subr.mxu0 0.0
    %101 = vmatpush1.msra.mxu0 0.0
    %102 = vmatprep.subr.mxu0 0.0
    %103 = vmatpush1.msra.mxu0 0.0
    %104 = vmatprep.subr.mxu0 0.0
    %105 = vmatpush1.msra.mxu0 0.0
    %106 = vmatprep.subr.mxu0 0.0
    %107 = vmatpush1.msra.mxu0 0.0
    %108 = vmatprep.subr.mxu0 0.0
    %109 = vmatpush1.msra.mxu0 0.0
    %110 = vmatprep.subr.mxu0 0.0
    %111 = vmatpush1.msra.mxu0 0.0
    %112 = vmatprep.subr.mxu0 0.0
    %113 = vmatpush1.msra.mxu0 0.0
    %114 = vmatprep.subr.mxu0 0.0
    %115 = vmatpush1.msra.mxu0 0.0
    %116 = vmatprep.subr.mxu0 0.0
    %117 = vmatpush1.msra.mxu0 0.0
    %118 = vmatprep.subr.mxu0 0.0
    %119 = vmatpush1.msra.mxu0 0.0
    %120 = vmatprep.mubr.f32.mxu0 0.0
    %121 = vmatmul.mubr.f32.gmra.mrb[0].mxu0 %v32
    %v122 = vpop.f32.mrb[0].mxu0
    %v123 = vadd.f32 %v54, %v122
    %v124 = vpop.f32.mrb[0].mxu0
    %125 = vdwg.mxu0
    %v126 = vmul.f32 %v123, 0.1
    %v127 = vmax.f32 %v123, %v126
    %v128 = vld [vmem:[%s3] sm:$0xff]
    %v129 = vld [vmem:[%s3 + $0x8] sm:$0xff]
    %v130 = vld [vmem:[%s3 + $0x10] sm:$0xff]
    %v131 = vld [vmem:[%s3 + $0x18] sm:$0xff]
    %v132 = vld [vmem:[%s3 + $0x20] sm:$0xff]
    %v133 = vld [vmem:[%s3 + $0x28] sm:$0xff]
    %v134 = vld [vmem:[%s3 + $0x30] sm:$0xff]
    %v135 = vld [vmem:[%s3 + $0x38] sm:$0xff]
    %v136 = vld [vmem:[%s3 + $0x40] sm:$0xff]
    %v137 = vld [vmem:[%s3 + $0x48] sm:$0xff]
    %v138 = vld [vmem:[%s3 + $0x50] sm:$0xff]
    %v139 = vld [vmem:[%s3 + $0x58] sm:$0xff]
    %v140 = vld [vmem:[%s3 + $0x60] sm:$0xff]
    %v141 = vld [vmem:[%s3 + $0x68] sm:$0xff]
    %v142 = vld [vmem:[%s3 + $0x70] sm:$0xff]
    %v143 = vld [vmem:[%s3 + $0x78] sm:$0xff]
    %v144 = vld [vmem:[%s4] sm:$0x1]
    %v146 = vlaneseq
    %v147 = vshrl.u32 %v146, 7
    %v148 = vsub.s32 0, %v147
    %v149 = vrot.slane %v144, %v148
    %151 = vmatprep.subr.mxu0 0.0
    %152 = vmatpush1.msra.mxu0 %v128
    %153 = vmatprep.subr.mxu0 0.0
    %154 = vmatpush1.msra.mxu0 %v129
    %155 = vmatprep.subr.mxu0 0.0
    %156 = vmatpush1.msra.mxu0 %v130
    %157 = vmatprep.subr.mxu0 0.0
    %158 = vmatpush1.msra.mxu0 %v131
    %159 = vmatprep.subr.mxu0 0.0
    %160 = vmatpush1.msra.mxu0 %v132
    %161 = vmatprep.subr.mxu0 0.0
    %162 = vmatpush1.msra.mxu0 %v133
    %163 = vmatprep.subr.mxu0 0.0
    %164 = vmatpush1.msra.mxu0 %v134
    %165 = vmatprep.subr.mxu0 0.0
    %166 = vmatpush1.msra.mxu0 %v135
    %167 = vmatprep.subr.mxu0 0.0
    %168 = vmatpush1.msra.mxu0 %v136
    %169 = vmatprep.subr.mxu0 0.0
    %170 = vmatpush1.msra.mxu0 %v137
    %171 = vmatprep.subr.mxu0 0.0
    %172 = vmatpush1.msra.mxu0 %v138
    %173 = vmatprep.subr.mxu0 0.0
    %174 = vmatpush1.msra.mxu0 %v139
    %175 = vmatprep.subr.mxu0 0.0
    %176 = vmatpush1.msra.mxu0 %v140
    %177 = vmatprep.subr.mxu0 0.0
    %178 = vmatpush1.msra.mxu0 %v141
    %179 = vmatprep.subr.mxu0 0.0
    %180 = vmatpush1.msra.mxu0 %v142
    %181 = vmatprep.subr.mxu0 0.0
    %182 = vmatpush1.msra.mxu0 %v143
    %183 = vmatprep.subr.mxu0 0.0
    %184 = vmatpush1.msra.mxu0 0.0
    %185 = vmatprep.subr.mxu0 0.0
    %186 = vmatpush1.msra.mxu0 0.0
    %187 = vmatprep.subr.mxu0 0.0
    %188 = vmatpush1.msra.mxu0 0.0
    %189 = vmatprep.subr.mxu0 0.0
    %190 = vmatpush1.msra.mxu0 0.0
    %191 = vmatprep.subr.mxu0 0.0
    %192 = vmatpush1.msra.mxu0 0.0
    %193 = vmatprep.subr.mxu0 0.0
    %194 = vmatpush1.msra.mxu0 0.0
    %195 = vmatprep.subr.mxu0 0.0
    %196 = vmatpush1.msra.mxu0 0.0
    %197 = vmatprep.subr.mxu0 0.0
    %198 = vmatpush1.msra.mxu0 0.0
    %199 = vmatprep.subr.mxu0 0.0
    %200 = vmatpush1.msra.mxu0 0.0
    %201 = vmatprep.subr.mxu0 0.0
    %202 = vmatpush1.msra.mxu0 0.0
    %203 = vmatprep.subr.mxu0 0.0
    %204 = vmatpush1.msra.mxu0 0.0
    %205 = vmatprep.subr.mxu0 0.0
    %206 = vmatpush1.msra.mxu0 0.0
    %207 = vmatprep.subr.mxu0 0.0
    %208 = vmatpush1.msra.mxu0 0.0
    %209 = vmatprep.subr.mxu0 0.0
    %210 = vmatpush1.msra.mxu0 0.0
    %211 = vmatprep.subr.mxu0 0.0
    %212 = vmatpush1.msra.mxu0 0.0
    %213 = vmatprep.subr.mxu0 0.0
    %214 = vmatpush1.msra.mxu0 0.0
    %215 = vmatprep.mubr.f32.mxu0 0.0
    %216 = vmatmul.mubr.f32.gmra.mrb[0].mxu0 %v127
    %v217 = vpop.f32.mrb[0].mxu0
    %v218 = vadd.f32 %v149, %v217
    %v219 = vpop.f32.mrb[0].mxu0
    %220 = vdwg.mxu0
    %vm221 = vcmask 15360
    %222 = vst.msk [vmem:[%s5] sm:$0xff] %vm221, %v218
    // Predicated region
    $region26: #{tpu_custom_call.1} parent=1 // pred_check
      _
    $region27: #{tpu_custom_call.1} parent=1 // pred_check_branch
      %224 = sbr.rel (0) target = $region29
    $region28: #{tpu_custom_call.1} parent=1 // pred_region
      _
    $region29: #{tpu_custom_call.1} parent=1 // pred_fallthru
      _
    // Predicated region
    $region30: #{tpu_custom_call.1} parent=1 // pred_check
      _
    $region31: #{tpu_custom_call.1} parent=1 // pred_check_branch
      %226 = sbr.rel (0) target = $region33
    $region32: #{tpu_custom_call.1} parent=1 // pred_region
      _
    $region33: #{tpu_custom_call.1} parent=1 // pred_fallthru
      _
    %227 = vsyncpa [#allocation3], 1

</llo_original>
